<compile_context>
chip_gen: v6e
topology: v6e:2x2x1
jax: 0.10.0
libtpu: 0.0.40
codegen_flags: <defaults>
</compile_context>

<pallas_src>
import jax
import jax.numpy as jnp
from jax.experimental import pallas as pl
from jax.experimental.pallas import tpu as pltpu

_LANE = 128
_SUBLANE = 8
# Budget for the double-buffered (input + output) blocks of one grid step.
_BLOCK_BUDGET = 12 * 1024 * 1024


def _ceil_div(a, b):
    return -(-a // b)


def _round_up(a, b):
    return _ceil_div(a, b) * b


def _largest_divisor_at_most(n, cap):
    cap = max(1, min(n, cap))
    for d in range(cap, 0, -1):
        if n % d == 0:
            return d
    return 1


def _choose_layout(B, C, O, L, itemsize):
    """Return (padded_L, L/128 columns, L-tile in 128-lane columns, batch tile)."""
    # Double-buffered (in + out) bytes per batch row per 128-lane column.
    per_col = 2 * (C + O) * _LANE * itemsize
    max_tlb = max(_SUBLANE, (_BLOCK_BUDGET // per_col) // _SUBLANE * _SUBLANE)

    l128 = _ceil_div(L, _LANE)
    if l128 <= max_tlb:
        n_l, tlb = 1, l128                       # single L block (full dim -> always legal)
    else:
        n_l = _ceil_div(l128, max_tlb)
        tlb = _round_up(_ceil_div(l128, n_l), _SUBLANE)   # multiple of 8 -> legal block dim
        l128 = n_l * tlb                         # small extra padding so tlb divides exactly

    per_row = per_col * tlb
    tb = _largest_divisor_at_most(B, max(1, _BLOCK_BUDGET // per_row))

    # v7x megacore: keep >=2 grid steps on a parallel axis when there is work to split.
    if (B // tb) * n_l == 1:
        if B > 1:
            tb = _largest_divisor_at_most(B, B // 2)
        elif tlb >= 2 * _SUBLANE:
            n_l = 2
            tlb = _round_up(_ceil_div(l128, 2), _SUBLANE)
            l128 = n_l * tlb

    return l128 * _LANE, l128, tlb, tb


def _wsum_kernel(w_ref, x_ref, o_ref):
    # w_ref : [O, I]              raw (un-normalized) weights, same tiny block every step
    # x_ref : [TB, I, TLB, 128]   lane/sublane-dense input block
    # o_ref : [TB, O, TLB, 128]   lane/sublane-dense output block
    num_in = x_ref.shape[1]
    num_out = o_ref.shape[1]

    # F.softmax(W) over dim=1 (the input axis); a single vreg, negligible per step.
    w = w_ref[...].astype(jnp.float32)
    w = w - jnp.max(w, axis=1, keepdims=True)
    e = jnp.exp(w)
    w_norm = e * pl.reciprocal(jnp.sum(e, axis=1, keepdims=True), approx=True)  # rows sum to 1

    # bf16 inputs: do the weighted sum in bf16 (bf16 VALU on v6e/v7x; Mosaic upcasts on v5e).
    cdt = jnp.bfloat16 if x_ref.dtype == jnp.bfloat16 else jnp.float32
    w_norm = w_norm.astype(cdt)

    # Tiny static channel contraction on the VPU (MXU at K=3/M=1 would be ~all padding).
    accs = [None] * num_out
    for i in range(num_in):                      # I is tiny (3 in MuSDRI) -> unrolled FMAs
        xi = x_ref[:, i].astype(cdt)             # [TB, TLB, 128] dense vregs
        for o in range(num_out):                 # O is tiny (1 in MuSDRI)
            t = w_norm[o:o + 1, i:i + 1] * xi    # (1,1) coefficient splat-broadcast
            accs[o] = t if accs[o] is None else accs[o] + t
    for o in range(num_out):
        o_ref[:, o] = accs[o].astype(o_ref.dtype)


def weight_sumone_linear_fwd(x, W):
    """x: [B, input_size, L], W: [output_size, input_size] -> [B, output_size, L]."""
    B, C, L = x.shape
    O, I = W.shape
    assert I == C, f"W input_size {I} must match x dim-1 {C}"

    lp, l128, tlb, tb = _choose_layout(B, C, O, L, x.dtype.itemsize)

    if lp != L:  # pad so every store is a full-lane, full-tile vst (no masked tail)
        x = jnp.pad(x, ((0, 0), (0, 0), (0, lp - L)))
    x4 = x.reshape(B, C, l128, _LANE)            # free reshape: splits the last axis

    grid = (B // tb, l128 // tlb)

    out4 = pl.pallas_call(
        _wsum_kernel,
        out_shape=jax.ShapeDtypeStruct((B, O, l128, _LANE), x.dtype),
        grid_spec=pltpu.PrefetchScalarGridSpec(
            num_scalar_prefetch=0,
            grid=grid,
            in_specs=[
                pl.BlockSpec((O, I), lambda b, l: (0, 0)),                    # tiny constant W
                pl.BlockSpec((tb, C, tlb, _LANE), lambda b, l: (b, 0, l, 0)),  # one big DMA/step
            ],
            out_specs=pl.BlockSpec((tb, O, tlb, _LANE), lambda b, l: (b, 0, l, 0)),
        ),
        compiler_params=pltpu.CompilerParams(
            dimension_semantics=("parallel", "parallel"),  # independent -> megacore-shardable
            vmem_limit_bytes=32 * 1024 * 1024,             # blocks budgeted to 12 MiB dbl-buffered
        ),
    )(W, x4)

    out = out4.reshape(B, O, lp)
    return out if lp == L else out[:, :, :L]


if __name__ == "__main__":
    # MuSDRI usage: combine 3 seasonal decompositions into 1 along the channel axis.
    B, C_in, C_out, L = 2, 3, 1, 256
    key = jax.random.PRNGKey(0)
    kx, kw = jax.random.split(key)

    x = jax.random.normal(kx, (B, C_in, L), jnp.float32)
    W = jax.random.normal(kw, (C_out, C_in), jnp.float32)

    out = weight_sumone_linear_fwd(x, W)
    jax.block_until_ready(out)

    # Pure-JAX reference mirroring the PyTorch forward exactly.
    w_norm = jax.nn.softmax(W, axis=1)
    ref = jnp.swapaxes(jnp.swapaxes(x, 1, 2) @ w_norm.T, 1, 2)

    assert out.shape == (B, C_out, L)
    # In-kernel softmax uses the approximate EUP reciprocal -> compare at 2e-3.
    assert jnp.allclose(out, ref, atol=2e-3, rtol=2e-3)
    print("KERNEL_OK")
</pallas_src>

<mosaic_0001>
module attributes {stable_mosaic.version = 11 : i64} {
  func.func @_wsum_kernel(%arg0: i32, %arg1: i32, %arg2: memref<1x3xf32, #tpu.memory_space<vmem>>, %arg3: memref<1x3x2x128xf32, #tpu.memory_space<vmem>>, %arg4: memref<1x1x2x128xf32, #tpu.memory_space<vmem>>) attributes {dimension_semantics = [#tpu.dimension_semantics<parallel>, #tpu.dimension_semantics<parallel>], iteration_bounds = array<i64: 2, 1>, scalar_prefetch = 0 : i64, scratch_operands = 0 : i64, tpu.core_type = #tpu.core_type<tc>, window_params = [{pipeline_mode = #tpu.pipeline_mode<synchronous>, transform_indices = @transform_0, window_bounds = array<i64: 1, 3>}, {transform_indices = @transform_1, window_bounds = array<i64: 1, 3, 2, 128>}, {transform_indices = @transform_2, window_bounds = array<i64: 1, 1, 2, 128>}]} {
    %c0 = arith.constant 0 : index
    %c0_0 = arith.constant 0 : index
    %0 = vector.load %arg2[%c0, %c0_0] : memref<1x3xf32, #tpu.memory_space<vmem>>, vector<1x3xf32>
    %cst = arith.constant dense<0xFF800000> : vector<1xf32>
    %1 = vector.multi_reduction <maximumf>, %0, %cst [1] : vector<1x3xf32> to vector<1xf32>
    %2 = vector.shape_cast %1 : vector<1xf32> to vector<1x1xf32>
    %3 = vector.broadcast %2 : vector<1x1xf32> to vector<1x3xf32>
    %4 = arith.subf %0, %3 : vector<1x3xf32>
    %5 = math.exp %4 : vector<1x3xf32>
    %cst_1 = arith.constant dense<0.000000e+00> : vector<1xf32>
    %6 = vector.multi_reduction <add>, %5, %cst_1 [1] : vector<1x3xf32> to vector<1xf32>
    %7 = vector.shape_cast %6 : vector<1xf32> to vector<1x1xf32>
    %8 = tpu.reciprocal %7 {approx = true} : vector<1x1xf32> -> vector<1x1xf32>
    %9 = vector.broadcast %8 : vector<1x1xf32> to vector<1x3xf32>
    %10 = arith.mulf %5, %9 : vector<1x3xf32>
    %c0_2 = arith.constant 0 : index
    %c0_3 = arith.constant 0 : index
    %c0_4 = arith.constant 0 : index
    %c0_5 = arith.constant 0 : index
    %11 = vector.load %arg3[%c0_2, %c0_3, %c0_4, %c0_5] : memref<1x3x2x128xf32, #tpu.memory_space<vmem>>, vector<1x1x2x128xf32>
    %12 = vector.shape_cast %11 : vector<1x1x2x128xf32> to vector<1x2x128xf32>
    %13 = vector.extract_strided_slice %10 {offsets = [0, 0], sizes = [1, 1], strides = [1, 1]} : vector<1x3xf32> to vector<1x1xf32>
    %14 = vector.shape_cast %13 : vector<1x1xf32> to vector<1x1x1xf32>
    %15 = vector.broadcast %14 : vector<1x1x1xf32> to vector<1x2x128xf32>
    %16 = arith.mulf %15, %12 : vector<1x2x128xf32>
    %c0_6 = arith.constant 0 : index
    %c1 = arith.constant 1 : index
    %c0_7 = arith.constant 0 : index
    %c0_8 = arith.constant 0 : index
    %17 = vector.load %arg3[%c0_6, %c1, %c0_7, %c0_8] : memref<1x3x2x128xf32, #tpu.memory_space<vmem>>, vector<1x1x2x128xf32>
    %18 = vector.shape_cast %17 : vector<1x1x2x128xf32> to vector<1x2x128xf32>
    %19 = vector.extract_strided_slice %10 {offsets = [0, 1], sizes = [1, 1], strides = [1, 1]} : vector<1x3xf32> to vector<1x1xf32>
    %20 = vector.shape_cast %19 : vector<1x1xf32> to vector<1x1x1xf32>
    %21 = vector.broadcast %20 : vector<1x1x1xf32> to vector<1x2x128xf32>
    %22 = arith.mulf %21, %18 : vector<1x2x128xf32>
    %23 = arith.addf %16, %22 : vector<1x2x128xf32>
    %c0_9 = arith.constant 0 : index
    %c2 = arith.constant 2 : index
    %c0_10 = arith.constant 0 : index
    %c0_11 = arith.constant 0 : index
    %24 = vector.load %arg3[%c0_9, %c2, %c0_10, %c0_11] : memref<1x3x2x128xf32, #tpu.memory_space<vmem>>, vector<1x1x2x128xf32>
    %25 = vector.shape_cast %24 : vector<1x1x2x128xf32> to vector<1x2x128xf32>
    %26 = vector.extract_strided_slice %10 {offsets = [0, 2], sizes = [1, 1], strides = [1, 1]} : vector<1x3xf32> to vector<1x1xf32>
    %27 = vector.shape_cast %26 : vector<1x1xf32> to vector<1x1x1xf32>
    %28 = vector.broadcast %27 : vector<1x1x1xf32> to vector<1x2x128xf32>
    %29 = arith.mulf %28, %25 : vector<1x2x128xf32>
    %30 = arith.addf %23, %29 : vector<1x2x128xf32>
    %c0_12 = arith.constant 0 : index
    %c0_13 = arith.constant 0 : index
    %c0_14 = arith.constant 0 : index
    %c0_15 = arith.constant 0 : index
    %31 = vector.load %arg4[%c0_12, %c0_13, %c0_14, %c0_15] : memref<1x1x2x128xf32, #tpu.memory_space<vmem>>, vector<1x1x2x128xf32>
    %32 = vector.shape_cast %31 : vector<1x1x2x128xf32> to vector<1x2x128xf32>
    %33 = vector.shape_cast %30 : vector<1x2x128xf32> to vector<1x1x2x128xf32>
    tpu.vector_store %arg4[%c0_12, %c0_13, %c0_14, %c0_15], %33 {strides = array<i32>} : memref<1x1x2x128xf32, #tpu.memory_space<vmem>>, vector<1x1x2x128xf32>,
    return
  }
  func.func @transform_0(%arg0: i32, %arg1: i32) -> (i32, i32) {
    %c0_i32 = arith.constant 0 : i32
    %c0_i32_0 = arith.constant 0 : i32
    %c0_i32_1 = arith.constant 0 : i32
    return %c0_i32, %c0_i32_0 : i32, i32
  }
  func.func @transform_1(%arg0: i32, %arg1: i32) -> (i32, i32, i32, i32) {
    %c0_i32 = arith.constant 0 : i32
    %c0_i32_0 = arith.constant 0 : i32
    %c0_i32_1 = arith.constant 0 : i32
    return %arg0, %c0_i32, %arg1, %c0_i32_0 : i32, i32, i32, i32
  }
  func.func @transform_2(%arg0: i32, %arg1: i32) -> (i32, i32, i32, i32) {
    %c0_i32 = arith.constant 0 : i32
    %c0_i32_0 = arith.constant 0 : i32
    %c0_i32_1 = arith.constant 0 : i32
    return %arg0, %c0_i32, %arg1, %c0_i32_0 : i32, i32, i32, i32
  }
}

</mosaic_0001>

<llo_original>
// kernel: tpu_custom_call.1
$region0: #{tpu_custom_call.1}
  #allocation0 [shape = 'u32[]', space=smem, size = 0x4, offset = 0x4, fixed_abs, tag = 'smem constant byte address 0x4 - core index']
  #allocation1 [shape = 'u32[144,128]{1,0:T(1,128)}', space=vmem, size = 0x12000, scoped, tag = 'internal scratch']
  %s0 = inlined_call_operand.hbm [shape: f32[1,3], index: 0, kind: input, shape index: {}]
  %s1 = inlined_call_operand.hbm [shape: f32[2,3,2,128], index: 1, kind: input, shape index: {}]
  %s2 = inlined_call_operand.hbm [shape: f32[2,1,2,128], index: 2, kind: output, shape index: {}]
  %s3 = sld [smem:[#allocation0]]
  $region49: #{tpu_custom_call.1} parent=0
    _
  %s5 = ssub.s32 1, %s3
  %s6 = scalar_select 0, %s5, %s3
  $region1: #{tpu_custom_call.1} parent=0
    #allocation2 [shape = 'u8[512]{0}', space=vmem, size = 0x400, scoped, tag = 'input window, operand 0, single buffered']
    #allocation3 [shape = 's32[2]{0}', space=sflag, size = 0x8, scoped, tag = 'scoped memory for tpu_custom_call.1']
    #allocation4 [shape = 's32[2]{0}', space=sflag, size = 0x8, scoped, tag = 'scoped memory for tpu_custom_call.1']
    #allocation5 [shape = 'u8[6144]{0}', space=vmem, size = 0x1800, scoped, tag = 'input window, operand 1']
    #allocation6 [shape = 's32[2]{0}', space=sflag, size = 0x8, scoped, tag = 'scoped memory for tpu_custom_call.1']
    #allocation7 [shape = 'u8[2048]{0}', space=vmem, size = 0x800, scoped, tag = 'output window, operand 0']
    %7 = vsyncpa [#allocation3], 0
    %8 = vsyncpa [#allocation6], 0
    %s9 = scalar_lea.sflag [#allocation6], 1
    %10 = vsyncpa %s9, 0
    %11 = vsyncpa [#allocation4], 0
    %s12 = scalar_lea.sflag [#allocation4], 1
    %13 = vsyncpa %s12, 0
    loop: start=0, step=1, limit=4
    $region2: #{tpu_custom_call.1} parent=1 // loop_pre_header
      _
    $region3: #{tpu_custom_call.1} parent=1 // loop_header
      %s15 = sphi 0, %s19
      %p16 = scmp.ge.s32.totalorder %s15, 4
      %s22 = sphi 0, %s34
      %s23 = sphi 0, %s30
      %s24 = sphi 0, %s22
      %s25 = sphi 0, %s23
      %s26 = sphi 0, %s24
      %s27 = sphi 0, %s25
      %s35 = sphi 0, %s35
      %s37 = sphi 0, %s35
      %s38 = sphi 0, %s37
      %s52 = sphi 0, %s38
      %s60 = sphi 0, %s62
      %s63 = sphi 0, %s60
      %s64 = sphi 0, %s63
      %s80 = sphi 0, %s64
      %s88 = sphi 0, %s90
      %s91 = sphi 0, %s88
      %s92 = sphi 0, %s91
      %s108 = sphi 0, %s92
    $region4: #{tpu_custom_call.1} parent=1 // loop_header_branch
      %18 = sbr.rel (%p16) target = $region8
    $region5: #{tpu_custom_call.1} parent=1 // loop_body
      %s20 = ssub.s32 %s15, 1
      %s21 = ssub.s32 %s15, 2
      %s28 = sadd.s32 1, %s23
      %p29 = scmp.ge.s32.totalorder %s28, 1
      %s30 = scalar_select %p29, 0, %s28
      %s31 = sadd.s32 1, %s22
      %s32 = scalar_select %p29, %s31, %s22
      %p33 = scmp.ge.s32.totalorder %s32, 2
      %s34 = scalar_select %p33, 0, %s32
      %s36 = sadd.s32 %s35, 1
      %p39 = scmp.eq.s32.totalorder %s15, 1
      %p40 = scmp.ne.s32.totalorder %s35, %s37
      %p41 = scmp.eq.s32.totalorder %s15, 0
      %p42 = por %p40, %p41
      %p43 = scmp.ne.s32.totalorder %s35, %s37
      %p44 = scmp.eq.s32.totalorder %s20, 1
      %p45 = por %p43, %p44
      %p46 = scmp.ne.s32.totalorder %s37, %s38
      %p47 = scmp.eq.s32.totalorder %s20, 0
      %p48 = por %p46, %p47
      %p49 = scmp.ne.s32.totalorder %s37, %s38
      %p50 = scmp.eq.s32.totalorder %s21, 1
      %p51 = por %p49, %p50
      %p53 = scmp.ne.s32.totalorder %s38, %s52
      %p54 = scmp.eq.s32.totalorder %s21, 0
      %p55 = por %p53, %p54
      %s56 = ssub.s32 %s22, %s34
      %s57 = ssub.s32 %s23, %s30
      %s58 = sor.u32 %s56, %s57
      %p59 = scmp.eq.s32.totalorder %s58, 0
      %s61 = sadd.s32 %s60, 1
      %s62 = scalar_select %p59, %s60, %s61
      %p65 = pneg %p59
      %p66 = scmp.eq.s32.totalorder %s15, 1
      %p67 = por %p65, %p66
      %p68 = scmp.ne.s32.totalorder %s60, %s63
      %p69 = scmp.eq.s32.totalorder %s15, 0
      %p70 = por %p68, %p69
      %p71 = scmp.ne.s32.totalorder %s60, %s63
      %p72 = scmp.eq.s32.totalorder %s20, 1
      %p73 = por %p71, %p72
      %p74 = scmp.ne.s32.totalorder %s63, %s64
      %p75 = scmp.eq.s32.totalorder %s20, 0
      %p76 = por %p74, %p75
      %p77 = scmp.ne.s32.totalorder %s63, %s64
      %p78 = scmp.eq.s32.totalorder %s21, 1
      %p79 = por %p77, %p78
      %p81 = scmp.ne.s32.totalorder %s64, %s80
      %p82 = scmp.eq.s32.totalorder %s21, 0
      %p83 = por %p81, %p82
      %s84 = ssub.s32 %s22, %s34
      %s85 = ssub.s32 %s23, %s30
      %s86 = sor.u32 %s84, %s85
      %p87 = scmp.eq.s32.totalorder %s86, 0
      %s89 = sadd.s32 %s88, 1
      %s90 = scalar_select %p87, %s88, %s89
      %p93 = pneg %p87
      %p94 = scmp.eq.s32.totalorder %s15, 1
      %p95 = por %p93, %p94
      %p96 = scmp.ne.s32.totalorder %s88, %s91
      %p97 = scmp.eq.s32.totalorder %s15, 0
      %p98 = por %p96, %p97
      %p99 = scmp.ne.s32.totalorder %s88, %s91
      %p100 = scmp.eq.s32.totalorder %s20, 1
      %p101 = por %p99, %p100
      %p102 = scmp.ne.s32.totalorder %s91, %s92
      %p103 = scmp.eq.s32.totalorder %s20, 0
      %p104 = por %p102, %p103
      %p105 = scmp.ne.s32.totalorder %s91, %s92
      %p106 = scmp.eq.s32.totalorder %s21, 1
      %p107 = por %p105, %p106
      %p109 = scmp.ne.s32.totalorder %s92, %s108
      %p110 = scmp.eq.s32.totalorder %s21, 0
      %p111 = por %p109, %p110
      %p112 = scmp.le.s32.totalorder 1, %s15
      %p113 = scmp.lt.s32.totalorder %s15, 3
      %p114 = pnand %p112, %p113
      %p115 = pneg %p114
      // Predicated region
      $region9: #{tpu_custom_call.1} parent=5 // pred_check
        _
      $region10: #{tpu_custom_call.1} parent=5 // pred_check_branch
        %117 = sbr.rel (%p114) target = $region12
      $region11: #{tpu_custom_call.1} parent=5 // pred_region
        %s118 = ssub.s32 %s15, 1
        // Predicated region
        $region13: #{tpu_custom_call.1} parent=11 // pred_check
          %p119 = pneg %p48
        $region14: #{tpu_custom_call.1} parent=11 // pred_check_branch
          %121 = sbr.rel (%p119) target = $region16
        $region15: #{tpu_custom_call.1} parent=11 // pred_region
          %s123 = ssub.s32 16, 16
          %124 = vsyncadd [#allocation3], %s123
          %s126 = sshll.u32 [#allocation2], 4
          %s127 = int_to_ptr.vmem [resolvable:$true] %s126
          %129 = dma.hbm_to_vmem [thread:$0]  %s0, 16, %s127, [#allocation3]
        $region16: #{tpu_custom_call.1} parent=11 // pred_fallthru
          _
      $region12: #{tpu_custom_call.1} parent=5 // pred_fallthru
        _
      %p130 = scmp.lt.s32.totalorder %s15, 2
      // Predicated region
      $region17: #{tpu_custom_call.1} parent=5 // pred_check
        %p131 = pneg %p130
      $region18: #{tpu_custom_call.1} parent=5 // pred_check_branch
        %133 = sbr.rel (%p131) target = $region20
      $region19: #{tpu_custom_call.1} parent=5 // pred_region
        // Predicated region
        $region21: #{tpu_custom_call.1} parent=19 // pred_check
          %p134 = pneg %p70
        $region22: #{tpu_custom_call.1} parent=19 // pred_check_branch
          %136 = sbr.rel (%p134) target = $region24
        $region23: #{tpu_custom_call.1} parent=19 // pred_region
          %s137 = sand.u32 %s60, 1
          %s138 = scalar_lea.sflag [#allocation6], %s137
          %s139 = sand.u32 %s60, 1
          %s140 = smul.addr %s139, 6
          %s141 = scalar_lea.vmem [#allocation5], %s140
          %s143 = ssub.s32 96, 96
          %144 = vsyncadd %s138, %s143
          %s145 = smul.addr %s22, 3
          %s146 = sadd.s32 %s23, %s145
          %s147 = smul.addr %s146, 32
          %s148 = scalar_lea.hbm %s1, %s147
          %s149 = sshll.u32 %s141, 4
          %s150 = int_to_ptr.vmem [resolvable:$true] %s149
          %155 = dma.hbm_to_vmem [thread:$0]  %s148, 96, %s150, %s138, 32, 32, 2
        $region24: #{tpu_custom_call.1} parent=19 // pred_fallthru
          _
      $region20: #{tpu_custom_call.1} parent=5 // pred_fallthru
        _
      %p156 = scmp.le.s32.totalorder 1, %s15
      %p157 = scmp.lt.s32.totalorder %s15, 3
      %p158 = pnand %p156, %p157
      %p159 = pneg %p158
      // Predicated region
      $region25: #{tpu_custom_call.1} parent=5 // pred_check
        _
      $region26: #{tpu_custom_call.1} parent=5 // pred_check_branch
        %161 = sbr.rel (%p158) target = $region28
      $region27: #{tpu_custom_call.1} parent=5 // pred_region
        %s162 = ssub.s32 %s15, 1
        // Predicated region
        $region29: #{tpu_custom_call.1} parent=27 // pred_check
          %p163 = pneg %p48
        $region30: #{tpu_custom_call.1} parent=27 // pred_check_branch
          %165 = sbr.rel (%p163) target = $region32
        $region31: #{tpu_custom_call.1} parent=27 // pred_region
          %166 = dma.done [#allocation3], 16
        $region32: #{tpu_custom_call.1} parent=27 // pred_fallthru
          _
        %s167 = sand.u32 %s63, 1
        %s168 = scalar_lea.sflag [#allocation6], %s167
        %s169 = sand.u32 %s63, 1
        %s170 = smul.addr %s169, 6
        %s171 = scalar_lea.vmem [#allocation5], %s170
        // Predicated region
        $region33: #{tpu_custom_call.1} parent=27 // pred_check
          %p172 = pneg %p76
        $region34: #{tpu_custom_call.1} parent=27 // pred_check_branch
          %174 = sbr.rel (%p172) target = $region36
        $region35: #{tpu_custom_call.1} parent=27 // pred_region
          %175 = dma.done %s168, 96
        $region36: #{tpu_custom_call.1} parent=27 // pred_fallthru
          _
        %p176 = pneg %p48
        %p177 = pneg %p45
        %s178 = sand.u32 %s63, 1
        %s179 = scalar_lea.sflag [#allocation6], %s178
        %s180 = sand.u32 %s63, 1
        %s181 = smul.addr %s180, 6
        %s182 = scalar_lea.vmem [#allocation5], %s181
        %p183 = pneg %p76
        %p184 = pneg %p73
        %p185 = pneg %p104
        %p186 = pneg %p101
        %s187 = sand.u32 %s91, 1
        %s188 = scalar_lea.sflag [#allocation4], %s187
        %s189 = sand.u32 %s91, 1
        %s190 = smul.addr %s189, 2
        %s191 = scalar_lea.vmem [#allocation7], %s190
        %v192 = vld [vmem:[#allocation2] sm:$0x1]
        %vm193 = vcmask 16384
        %v194 = vsel %vm193, %v192, -inf
        %195 = vmax.xlane.f32.xlu0 %v194
        %v196 = vpop.xlane.xlu0 %195
        %v197 = vsub.f32 %v192, %v196
        %v198 = vmul.f32 %v197, 1.442695
        %v199 = vpow.pop %v198
        %v200 = vsel %vm193, %v199, 0.0
        %201 = vadd.xlane.f32.xlu0 %v200
        %v202 = vpop.xlane.xlu0 %201
        %v203 = vrcp.pop %v202
        %v204 = vmul.f32 %v199, %v203
        %v205 = vld [vmem:[%s171] sm:$0x3]
        %v207 = vlaneseq
        %v208 = vshrl.u32 %v207, 7
        %v209 = vsub.s32 0, %v208
        %v210 = vrot.slane %v204, %v209
        %211 = vset.pattern.permute.xlu0 0
        %212 = vperm.xlu0 %211, %v210
        %v213 = vpop.permute.xlu0 %212
        %v215 = vmul.f32 %v213, %v205
        %s216 = scalar_lea.vmem %s171, 2 [#allocation5]
        %v217 = vld [vmem:[%s216] sm:$0x3]
        %218 = vset.pattern.permute.xlu0 1
        %219 = vperm.xlu0 %218, %v210
        %v220 = vpop.permute.xlu0 %219
        %v222 = vmul.f32 %v220, %v217
        %v223 = vadd.f32 %v215, %v222
        %s224 = scalar_lea.vmem %s171, 4 [#allocation5]
        %v225 = vld [vmem:[%s224] sm:$0x3]
        %226 = vset.pattern.permute.xlu0 2
        %227 = vperm.xlu0 %226, %v210
        %v228 = vpop.permute.xlu0 %227
        %v230 = vmul.f32 %v228, %v225
        %v231 = vadd.f32 %v223, %v230
        %232 = vst [vmem:[%s191] sm:$0x3] %v231
        %s233 = sand.u32 %s91, 1
        %s234 = scalar_lea.sflag [#allocation4], %s233
        %s235 = sand.u32 %s91, 1
        %s236 = smul.addr %s235, 2
        %s237 = scalar_lea.vmem [#allocation7], %s236
        // Predicated region
        $region37: #{tpu_custom_call.1} parent=27 // pred_check
          %p238 = pneg %p101
        $region38: #{tpu_custom_call.1} parent=27 // pred_check_branch
          %240 = sbr.rel (%p238) target = $region40
        $region39: #{tpu_custom_call.1} parent=27 // pred_region
          %s242 = ssub.s32 32, 32
          %243 = vsyncadd %s234, %s242
          %s244 = sadd.s32 %s25, %s24
          %s245 = smul.addr %s244, 32
          %s246 = scalar_lea.hbm %s2, %s245
          %s248 = sshll.u32 %s237, 4
          %s249 = int_to_ptr.vmem [resolvable:$true] %s248
          %251 = dma.vmem_to_hbm [thread:$0]  %s249, 32, %s246, %s234
        $region40: #{tpu_custom_call.1} parent=27 // pred_fallthru
          _
      $region28: #{tpu_custom_call.1} parent=5 // pred_fallthru
        _
      %p252 = scmp.le.s32.totalorder 2, %s15
      // Predicated region
      $region41: #{tpu_custom_call.1} parent=5 // pred_check
        %p253 = pneg %p252
      $region42: #{tpu_custom_call.1} parent=5 // pred_check_branch
        %255 = sbr.rel (%p253) target = $region44
      $region43: #{tpu_custom_call.1} parent=5 // pred_region
        %s256 = ssub.s32 %s15, 2
        // Predicated region
        $region45: #{tpu_custom_call.1} parent=43 // pred_check
          %p257 = pneg %p107
        $region46: #{tpu_custom_call.1} parent=43 // pred_check_branch
          %259 = sbr.rel (%p257) target = $region48
        $region47: #{tpu_custom_call.1} parent=43 // pred_region
          %s260 = sand.u32 %s92, 1
          %s261 = scalar_lea.sflag [#allocation4], %s260
          %s262 = sand.u32 %s92, 1
          %s263 = smul.addr %s262, 2
          %s264 = scalar_lea.vmem [#allocation7], %s263
          %265 = dma.done %s261, 32
        $region48: #{tpu_custom_call.1} parent=43 // pred_fallthru
          _
      $region44: #{tpu_custom_call.1} parent=5 // pred_fallthru
        _
    $region6: #{tpu_custom_call.1} parent=1 // loop_footer
      %s19 = sadd.s32 1, %s15
    $region7: #{tpu_custom_call.1} parent=1 // loop_footer_branch
      %14 = sbr.rel target = $region3
    $region8: #{tpu_custom_call.1} parent=1 // loop_exit
      _
    %266 = vsyncpa [#allocation3], 1
    %s267 = scalar_lea.sflag [#allocation3], 1
    %268 = vsyncpa %s267, 1
    %269 = vsyncpa [#allocation6], 1
    %s270 = scalar_lea.sflag [#allocation6], 1
    %271 = vsyncpa %s270, 1
    %272 = vsyncpa [#allocation4], 1
    %s273 = scalar_lea.sflag [#allocation4], 1
    %274 = vsyncpa %s273, 1

</llo_original>
